<compile_context>
chip_gen: v7x
topology: tpu7x:2x2x1
jax: 0.10.0
libtpu: 0.0.40
codegen_flags: <defaults>
</compile_context>

<pallas_src>
import jax
import jax.numpy as jnp
from jax import lax
from jax.experimental import pallas as pl
from jax.experimental.pallas import tpu as pltpu


def _round_up(x, m):
    return -(-x // m) * m


def _cdiv(a, b):
    return -(-a // b)


def _vmem_capacity_bytes():
    try:
        cap = int(pltpu.get_tpu_info().vmem_capacity_bytes)
        if cap > 0:
            return cap
    except Exception:
        pass
    return 64 * 1024 * 1024  # conservative default (v7x physical VMEM)


def _num_tensorcores():
    """Best-effort TensorCores-per-chip query (decides the parallel split)."""
    try:
        info = pltpu.get_tpu_info()
        for attr in ("num_cores", "num_tensorcores",
                     "tensorcores_per_chip", "cores_per_chip"):
            v = getattr(info, attr, None)
            if isinstance(v, int) and v > 0:
                return v
    except Exception:
        pass
    try:
        kind = jax.devices()[0].device_kind.lower()
        if any(t in kind for t in ("v5 lite", "v5e", "v6 lite", "v6e")):
            return 1  # single-TensorCore chips
        if any(t in kind for t in ("v7", "v5p", "v4", "v3", "v2")):
            return 2  # megacore / dual-TC chips
    except Exception:
        pass
    return 1


def _make_loss_kernel(w_gt, need_w_crop, has_coarse, tile_h, h_gt, n_h_per,
                      mask_tail, fold8):
    """Fused diff + accumulate kernel.

    Refs (coarse variant):
      pred_ref   : (BC, tile_h, Wp_blk)  input  (Wp_blk >= w_gt; crop fused)
      gt_ref     : (BC, tile_h, w_gt)    input
      coarse_ref : (BC, tile_h, w_gt)    input  (only if has_coarse)
      out_ref    : (BC, n_cols)          output (written at last h step)
      a_pg, s_pg[, a_cg, s_cg] : (BC, acc_rows, w_gt) f32 VMEM accumulators
    """

    def kernel(*refs):
        if has_coarse:
            pred_ref, gt_ref, coarse_ref, out_ref, a_pg, s_pg, a_cg, s_cg = refs
            accs = (a_pg, s_pg, a_cg, s_cg)
        else:
            pred_ref, gt_ref, out_ref, a_pg, s_pg = refs
            accs = (a_pg, s_pg)

        p = pl.program_id(0)
        h = pl.program_id(1)

        @pl.when(h == 0)
        def _init():
            for acc in accs:
                acc[...] = jnp.zeros_like(acc)

        # Hot loop: VALU-only elementwise work; no XLU, no narrow stores.
        gt = gt_ref[...].astype(jnp.float32)
        if need_w_crop:
            pred = pred_ref[:, :, :w_gt].astype(jnp.float32)   # fused W-crop
        else:
            pred = pred_ref[...].astype(jnp.float32)
        d = pred - gt
        if has_coarse:
            dc = coarse_ref[...].astype(jnp.float32) - gt

        if mask_tail:
            # Zero the rows of the (partial) last H block that fall past h_gt.
            row_start = (p * n_h_per + h) * tile_h
            rows = lax.broadcasted_iota(jnp.int32, (1, tile_h, 1), 1)
            valid = rows < (h_gt - row_start)
            d = jnp.where(valid, d, 0.0)
            if has_coarse:
                dc = jnp.where(valid, dc, 0.0)

        bc = gt.shape[0]

        def fold(x):
            # (bc, tile_h, w) -> (bc, 8, w): sublane-aligned, VALU-only adds.
            if fold8:
                return jnp.sum(x.reshape(bc, tile_h // 8, 8, w_gt), axis=1)
            return x

        a_pg[...] += fold(jnp.abs(d))
        s_pg[...] += fold(d * d)
        if has_coarse:
            a_cg[...] += fold(jnp.abs(dc))
            s_cg[...] += fold(dc * dc)

        @pl.when(h == pl.num_programs(1) - 1)
        def _finalize():
            # Sublane reduce first, then one lane (XLU) reduce per bc row,
            # then the narrow per-column store; all of this runs once.
            def rsum(acc):
                s = jnp.sum(acc[...], axis=1)                 # (bc, w)
                return jnp.sum(s, axis=1, keepdims=True)      # (bc, 1)

            out_ref[:, 0:1] = rsum(a_pg)
            out_ref[:, 1:2] = rsum(s_pg)
            if has_coarse:
                out_ref[:, 2:3] = rsum(a_cg)
                out_ref[:, 3:4] = rsum(s_cg)

    return kernel


def _loss_sums(pred3, gt3, coarse3, h_gt, w_gt):
    """Per-(b, c) partial sums.

    pred3   : (BC, Hp, Wp)  with Hp >= h_gt, Wp >= w_gt (crop fused in-kernel)
    gt3     : (BC, h_gt, w_gt)
    coarse3 : (BC, h_gt, w_gt) or None
    returns : (BC, n_cols) f32, columns =
              [sum|pred-gt|, sum(pred-gt)^2 (, sum|coarse-gt|, sum(coarse-gt)^2)]
    """
    BC, Hp, Wp = pred3.shape
    has_coarse = coarse3 is not None
    n_cols = 4 if has_coarse else 2

    it_p = jnp.dtype(pred3.dtype).itemsize
    it_g = jnp.dtype(gt3.dtype).itemsize
    it_c = jnp.dtype(coarse3.dtype).itemsize if has_coarse else 0

    # Only stream the pred lanes that can contain gt columns.
    w128 = _round_up(w_gt, 128)
    pred_w = Wp if (Wp == w_gt or w128 >= Wp) else w128
    need_w_crop = pred_w > w_gt

    # --- generation-aware VMEM plan ---------------------------------------
    vmem_cap = _vmem_capacity_bytes()
    vmem_limit = max(min(vmem_cap * 3 // 4, 100 * 1024 * 1024), 32 * 1024 * 1024)

    acc_bytes = n_cols * BC * 8 * w128 * 4
    # Bytes per gt-row per grid step, with double-buffered input streams.
    row_bytes = 2 * BC * (pred_w * it_p + w_gt * it_g + w_gt * it_c)
    budget = max(vmem_limit - 8 * 1024 * 1024 - acc_bytes, 8 * row_bytes)

    if h_gt >= 8:
        max_tile = h_gt if h_gt % 8 == 0 else (h_gt // 8) * 8
        tile_h = min(max_tile, max(8, (budget // row_bytes) // 8 * 8))
        fold8 = True
    else:
        tile_h = h_gt          # tiny-image fallback: single sub-8-row block
        fold8 = False
    n_h_total = _cdiv(h_gt, tile_h)

    n_cores = _num_tensorcores()
    if n_cores >= 2 and n_h_total < 2 and fold8 and tile_h % 16 == 0:
        tile_h //= 2           # create 2-way work for the parallel axis
        n_h_total = _cdiv(h_gt, tile_h)
    mask_tail = (n_h_total * tile_h != h_gt)
    n_par = 2 if (n_cores >= 2 and n_h_total >= 2 and n_h_total % 2 == 0) else 1
    # TODO(synk): odd n_h_total on 2-core chips currently runs on one core only.
    n_h_per = n_h_total // n_par

    acc_rows = 8 if fold8 else tile_h

    kernel = _make_loss_kernel(w_gt, need_w_crop, has_coarse, tile_h, h_gt,
                               n_h_per, mask_tail, fold8)

    def in_idx(pb, hb):
        return (0, pb * n_h_per + hb, 0)

    in_specs = [
        pl.BlockSpec((BC, tile_h, pred_w), in_idx),
        pl.BlockSpec((BC, tile_h, w_gt), in_idx),
    ]
    inputs = [pred3, gt3]
    if has_coarse:
        in_specs.append(pl.BlockSpec((BC, tile_h, w_gt), in_idx))
        inputs.append(coarse3)

    out_spec = pl.BlockSpec((None, BC, n_cols), lambda pb, hb: (pb, 0, 0))
    scratch = [pltpu.VMEM((BC, acc_rows, w_gt), jnp.float32)
               for _ in range(n_cols)]

    cost = pl.CostEstimate(
        flops=int((10 if has_coarse else 5) * BC * h_gt * w_gt),
        transcendentals=0,
        bytes_accessed=int(BC * h_gt * (pred_w * it_p + w_gt * it_g + w_gt * it_c)
                           + 4 * n_par * BC * n_cols),
    )

    out = pl.pallas_call(
        kernel,
        out_shape=jax.ShapeDtypeStruct((n_par, BC, n_cols), jnp.float32),
        grid_spec=pltpu.PrefetchScalarGridSpec(
            num_scalar_prefetch=0,
            grid=(n_par, n_h_per),
            in_specs=in_specs,
            out_specs=out_spec,
            scratch_shapes=scratch,
        ),
        compiler_params=pltpu.CompilerParams(
            dimension_semantics=("parallel", "arbitrary"),
            vmem_limit_bytes=int(vmem_limit),
        ),
        cost_estimate=cost,
    )(*inputs)

    # Each parallel slice contributes an independent partial sum.
    return jnp.sum(out, axis=0)


def synthesis_loss(pred_img, gt_img, coarse=None,
                   losses=("l1", "l2", "PSNR"),
                   lambdas=(1.0, 1.0, 1.0)):
    """JAX/Pallas equivalent of SynthesisLoss.forward (NCHW)."""
    B, C, Hg, Wg = gt_img.shape
    Hp, Wp = pred_img.shape[-2], pred_img.shape[-1]
    has_coarse = coarse is not None
    BC = B * C

    # No materialized crop: the kernel only walks gt's (Hg, Wg) window of pred.
    pred3 = pred_img.reshape(BC, Hp, Wp)
    gt3 = gt_img.reshape(BC, Hg, Wg)
    c3 = coarse.reshape(BC, Hg, Wg) if has_coarse else None

    sums = _loss_sums(pred3, gt3, c3, Hg, Wg).reshape(B, C, -1)

    n_elem = B * C * Hg * Wg
    abs_pg = jnp.sum(sums[..., 0])
    sq_pg = jnp.sum(sums[..., 1])
    sq_pg_b = jnp.sum(sums[..., 1], axis=1)          # per-sample sum over C,H,W
    if has_coarse:
        abs_cg = jnp.sum(sums[..., 2])
        sq_cg = jnp.sum(sums[..., 3])

    loss_results = []
    for name in losses:
        if name == "l1":
            err = abs_pg / n_elem
            if has_coarse:
                err = err + abs_cg / n_elem
            loss_results.append({"L1": err, "Total Loss": err})
        elif name == "l2":
            err = sq_pg / n_elem
            if has_coarse:
                err = err + sq_cg / n_elem
            loss_results.append({"L2": err, "Total Loss": err})
        elif name == "PSNR":
            # (p*0.5+0.5 - (g*0.5+0.5))^2 == 0.25*(p-g)^2; sum over C then
            # mean over H*W collapses to:
            mse_err = 0.25 * sq_pg_b / (Hg * Wg)      # (B,)
            psnr = 10.0 * jnp.log10(1.0 / mse_err)    # inf if mse==0, as torch
            loss_results.append({"psnr": jnp.mean(psnr)})
        else:
            # TODO(synk): 'content' (VGG19 perceptual) and 'SSIM' have no clean
            # in-script Pallas equivalent here.
            raise NotImplementedError(f"loss '{name}' not implemented")

    # Exact replica of SynthesisLoss.forward's dict-merging logic.
    loss_dir = {}
    for i, l in enumerate(loss_results):
        if "Total Loss" in l:
            if "Total Loss" in loss_dir:
                loss_dir["Total Loss"] = (
                    loss_dir["Total Loss"] + l["Total Loss"] * lambdas[i]
                )
            else:
                loss_dir["Total Loss"] = l["Total Loss"]
        loss_dir = dict(l, **loss_dir)
    return loss_dir


if __name__ == "__main__":
    key = jax.random.PRNGKey(0)
    k1, k2, k3 = jax.random.split(key, 3)

    B, C, H, W = 2, 3, 16, 16
    # pred is larger spatially to exercise the fused crop; values in [-1, 1].
    pred_img = jax.random.uniform(k1, (B, C, H + 4, W + 4),
                                  dtype=jnp.float32, minval=-1.0, maxval=1.0)
    gt_img = jax.random.uniform(k2, (B, C, H, W),
                                dtype=jnp.float32, minval=-1.0, maxval=1.0)
    coarse = jax.random.uniform(k3, (B, C, H, W),
                                dtype=jnp.float32, minval=-1.0, maxval=1.0)

    # --- with coarse (3-input / 4-accumulator kernel variant) ---
    out = synthesis_loss(pred_img, gt_img, coarse)
    out = jax.block_until_ready(out)

    pred_c = pred_img[:, :, :H, :W]
    l1_ref = jnp.mean(jnp.abs(pred_c - gt_img)) + jnp.mean(jnp.abs(coarse - gt_img))
    l2_ref = jnp.mean((pred_c - gt_img) ** 2) + jnp.mean((coarse - gt_img) ** 2)
    p01, g01 = pred_c * 0.5 + 0.5, gt_img * 0.5 + 0.5
    mse_ref = ((p01 - g01) ** 2).sum(axis=1).reshape(B, -1).mean(axis=1)
    psnr_ref = jnp.mean(10.0 * jnp.log10(1.0 / mse_ref))
    total_ref = l1_ref + 1.0 * l2_ref  # first Total unscaled, second * lambda

    assert jnp.allclose(out["L1"], l1_ref, rtol=1e-5, atol=1e-6)
    assert jnp.allclose(out["L2"], l2_ref, rtol=1e-5, atol=1e-6)
    assert jnp.allclose(out["psnr"], psnr_ref, rtol=1e-4, atol=1e-4)
    assert jnp.allclose(out["Total Loss"], total_ref, rtol=1e-5, atol=1e-6)

    # --- without coarse (2-input / 2-accumulator variant) ---
    out_nc = synthesis_loss(pred_img, gt_img, None)
    out_nc = jax.block_until_ready(out_nc)

    l1_nc = jnp.mean(jnp.abs(pred_c - gt_img))
    l2_nc = jnp.mean((pred_c - gt_img) ** 2)
    assert jnp.allclose(out_nc["L1"], l1_nc, rtol=1e-5, atol=1e-6)
    assert jnp.allclose(out_nc["L2"], l2_nc, rtol=1e-5, atol=1e-6)
    assert jnp.allclose(out_nc["psnr"], psnr_ref, rtol=1e-4, atol=1e-4)
    assert jnp.allclose(out_nc["Total Loss"], l1_nc + l2_nc, rtol=1e-5, atol=1e-6)

    # --- gt height not a multiple of 8 exercises the masked-tail H block ---
    H2, W2 = 20, 24
    k4, k5, k6 = jax.random.split(jax.random.PRNGKey(1), 3)
    pred2 = jax.random.uniform(k4, (B, C, H2 + 4, W2 + 8),
                               dtype=jnp.float32, minval=-1.0, maxval=1.0)
    gt2 = jax.random.uniform(k5, (B, C, H2, W2),
                             dtype=jnp.float32, minval=-1.0, maxval=1.0)
    coarse2 = jax.random.uniform(k6, (B, C, H2, W2),
                                 dtype=jnp.float32, minval=-1.0, maxval=1.0)
    out2 = synthesis_loss(pred2, gt2, coarse2)
    out2 = jax.block_until_ready(out2)

    pred2_c = pred2[:, :, :H2, :W2]
    l1_ref2 = jnp.mean(jnp.abs(pred2_c - gt2)) + jnp.mean(jnp.abs(coarse2 - gt2))
    l2_ref2 = jnp.mean((pred2_c - gt2) ** 2) + jnp.mean((coarse2 - gt2) ** 2)
    assert jnp.allclose(out2["L1"], l1_ref2, rtol=1e-5, atol=1e-6)
    assert jnp.allclose(out2["L2"], l2_ref2, rtol=1e-5, atol=1e-6)

    print("KERNEL_OK")
</pallas_src>

<mosaic_0001>
module attributes {stable_mosaic.version = 11 : i64} {
  func.func @kernel(%arg0: i32, %arg1: i32, %arg2: memref<6x16x20xf32, #tpu.memory_space<vmem>>, %arg3: memref<6x16x16xf32, #tpu.memory_space<vmem>>, %arg4: memref<6x16x16xf32, #tpu.memory_space<vmem>>, %arg5: memref<1x6x4xf32, #tpu.memory_space<vmem>>, %arg6: memref<6x8x16xf32, #tpu.memory_space<vmem>>, %arg7: memref<6x8x16xf32, #tpu.memory_space<vmem>>, %arg8: memref<6x8x16xf32, #tpu.memory_space<vmem>>, %arg9: memref<6x8x16xf32, #tpu.memory_space<vmem>>) attributes {dimension_semantics = [#tpu.dimension_semantics<parallel>, #tpu.dimension_semantics<arbitrary>], iteration_bounds = array<i64: 1, 1>, scalar_prefetch = 0 : i64, scratch_operands = 4 : i64, tpu.core_type = #tpu.core_type<tc>, window_params = [{transform_indices = @transform_0, window_bounds = array<i64: 6, 16, 20>}, {transform_indices = @transform_1, window_bounds = array<i64: 6, 16, 16>}, {transform_indices = @transform_2, window_bounds = array<i64: 6, 16, 16>}, {transform_indices = @transform_3, window_bounds = array<i64: 1, 6, 4>}]} {
    %c0_i32 = arith.constant 0 : i32
    %0 = arith.cmpi eq, %arg1, %c0_i32 : i32
    %1 = arith.extui %0 : i1 to i32
    %c0_i32_0 = arith.constant 0 : i32
    %2 = arith.cmpi ne, %1, %c0_i32_0 : i32
    scf.if %2 {
      %cst_38 = arith.constant 0.000000e+00 : f32
      %35 = vector.broadcast %cst_38 : f32 to vector<6x8x16xf32>
      %c0_39 = arith.constant 0 : index
      %c0_40 = arith.constant 0 : index
      %c0_41 = arith.constant 0 : index
      %36 = vector.load %arg6[%c0_39, %c0_40, %c0_41] : memref<6x8x16xf32, #tpu.memory_space<vmem>>, vector<6x8x16xf32>
      tpu.vector_store %arg6[%c0_39, %c0_40, %c0_41], %35 {strides = array<i32>} : memref<6x8x16xf32, #tpu.memory_space<vmem>>, vector<6x8x16xf32>,
      %cst_42 = arith.constant 0.000000e+00 : f32
      %37 = vector.broadcast %cst_42 : f32 to vector<6x8x16xf32>
      %c0_43 = arith.constant 0 : index
      %c0_44 = arith.constant 0 : index
      %c0_45 = arith.constant 0 : index
      %38 = vector.load %arg7[%c0_43, %c0_44, %c0_45] : memref<6x8x16xf32, #tpu.memory_space<vmem>>, vector<6x8x16xf32>
      tpu.vector_store %arg7[%c0_43, %c0_44, %c0_45], %37 {strides = array<i32>} : memref<6x8x16xf32, #tpu.memory_space<vmem>>, vector<6x8x16xf32>,
      %cst_46 = arith.constant 0.000000e+00 : f32
      %39 = vector.broadcast %cst_46 : f32 to vector<6x8x16xf32>
      %c0_47 = arith.constant 0 : index
      %c0_48 = arith.constant 0 : index
      %c0_49 = arith.constant 0 : index
      %40 = vector.load %arg8[%c0_47, %c0_48, %c0_49] : memref<6x8x16xf32, #tpu.memory_space<vmem>>, vector<6x8x16xf32>
      tpu.vector_store %arg8[%c0_47, %c0_48, %c0_49], %39 {strides = array<i32>} : memref<6x8x16xf32, #tpu.memory_space<vmem>>, vector<6x8x16xf32>,
      %cst_50 = arith.constant 0.000000e+00 : f32
      %41 = vector.broadcast %cst_50 : f32 to vector<6x8x16xf32>
      %c0_51 = arith.constant 0 : index
      %c0_52 = arith.constant 0 : index
      %c0_53 = arith.constant 0 : index
      %42 = vector.load %arg9[%c0_51, %c0_52, %c0_53] : memref<6x8x16xf32, #tpu.memory_space<vmem>>, vector<6x8x16xf32>
      tpu.vector_store %arg9[%c0_51, %c0_52, %c0_53], %41 {strides = array<i32>} : memref<6x8x16xf32, #tpu.memory_space<vmem>>, vector<6x8x16xf32>,
    } else {
    }
    %c0 = arith.constant 0 : index
    %c0_1 = arith.constant 0 : index
    %c0_2 = arith.constant 0 : index
    %3 = vector.load %arg3[%c0, %c0_1, %c0_2] : memref<6x16x16xf32, #tpu.memory_space<vmem>>, vector<6x16x16xf32>
    %c0_3 = arith.constant 0 : index
    %c0_4 = arith.constant 0 : index
    %c0_5 = arith.constant 0 : index
    %4 = vector.load %arg2[%c0_3, %c0_4, %c0_5] : memref<6x16x20xf32, #tpu.memory_space<vmem>>, vector<6x16x16xf32>
    %5 = arith.subf %4, %3 : vector<6x16x16xf32>
    %c0_6 = arith.constant 0 : index
    %c0_7 = arith.constant 0 : index
    %c0_8 = arith.constant 0 : index
    %6 = vector.load %arg4[%c0_6, %c0_7, %c0_8] : memref<6x16x16xf32, #tpu.memory_space<vmem>>, vector<6x16x16xf32>
    %7 = arith.subf %6, %3 : vector<6x16x16xf32>
    %c0_9 = arith.constant 0 : index
    %c0_10 = arith.constant 0 : index
    %c0_11 = arith.constant 0 : index
    %8 = vector.load %arg6[%c0_9, %c0_10, %c0_11] : memref<6x8x16xf32, #tpu.memory_space<vmem>>, vector<6x8x16xf32>
    %9 = math.absf %5 : vector<6x16x16xf32>
    %10 = vector.shape_cast %9 : vector<6x16x16xf32> to vector<6x2x8x16xf32>
    %cst = arith.constant dense<0.000000e+00> : vector<6x8x16xf32>
    %11 = vector.multi_reduction <add>, %10, %cst [1] : vector<6x2x8x16xf32> to vector<6x8x16xf32>
    %12 = arith.addf %8, %11 : vector<6x8x16xf32>
    %c0_12 = arith.constant 0 : index
    %c0_13 = arith.constant 0 : index
    %c0_14 = arith.constant 0 : index
    %13 = vector.load %arg6[%c0_12, %c0_13, %c0_14] : memref<6x8x16xf32, #tpu.memory_space<vmem>>, vector<6x8x16xf32>
    tpu.vector_store %arg6[%c0_12, %c0_13, %c0_14], %12 {strides = array<i32>} : memref<6x8x16xf32, #tpu.memory_space<vmem>>, vector<6x8x16xf32>,
    %c0_15 = arith.constant 0 : index
    %c0_16 = arith.constant 0 : index
    %c0_17 = arith.constant 0 : index
    %14 = vector.load %arg7[%c0_15, %c0_16, %c0_17] : memref<6x8x16xf32, #tpu.memory_space<vmem>>, vector<6x8x16xf32>
    %15 = arith.mulf %5, %5 : vector<6x16x16xf32>
    %16 = vector.shape_cast %15 : vector<6x16x16xf32> to vector<6x2x8x16xf32>
    %cst_18 = arith.constant dense<0.000000e+00> : vector<6x8x16xf32>
    %17 = vector.multi_reduction <add>, %16, %cst_18 [1] : vector<6x2x8x16xf32> to vector<6x8x16xf32>
    %18 = arith.addf %14, %17 : vector<6x8x16xf32>
    %c0_19 = arith.constant 0 : index
    %c0_20 = arith.constant 0 : index
    %c0_21 = arith.constant 0 : index
    %19 = vector.load %arg7[%c0_19, %c0_20, %c0_21] : memref<6x8x16xf32, #tpu.memory_space<vmem>>, vector<6x8x16xf32>
    tpu.vector_store %arg7[%c0_19, %c0_20, %c0_21], %18 {strides = array<i32>} : memref<6x8x16xf32, #tpu.memory_space<vmem>>, vector<6x8x16xf32>,
    %c0_22 = arith.constant 0 : index
    %c0_23 = arith.constant 0 : index
    %c0_24 = arith.constant 0 : index
    %20 = vector.load %arg8[%c0_22, %c0_23, %c0_24] : memref<6x8x16xf32, #tpu.memory_space<vmem>>, vector<6x8x16xf32>
    %21 = math.absf %7 : vector<6x16x16xf32>
    %22 = vector.shape_cast %21 : vector<6x16x16xf32> to vector<6x2x8x16xf32>
    %cst_25 = arith.constant dense<0.000000e+00> : vector<6x8x16xf32>
    %23 = vector.multi_reduction <add>, %22, %cst_25 [1] : vector<6x2x8x16xf32> to vector<6x8x16xf32>
    %24 = arith.addf %20, %23 : vector<6x8x16xf32>
    %c0_26 = arith.constant 0 : index
    %c0_27 = arith.constant 0 : index
    %c0_28 = arith.constant 0 : index
    %25 = vector.load %arg8[%c0_26, %c0_27, %c0_28] : memref<6x8x16xf32, #tpu.memory_space<vmem>>, vector<6x8x16xf32>
    tpu.vector_store %arg8[%c0_26, %c0_27, %c0_28], %24 {strides = array<i32>} : memref<6x8x16xf32, #tpu.memory_space<vmem>>, vector<6x8x16xf32>,
    %c0_29 = arith.constant 0 : index
    %c0_30 = arith.constant 0 : index
    %c0_31 = arith.constant 0 : index
    %26 = vector.load %arg9[%c0_29, %c0_30, %c0_31] : memref<6x8x16xf32, #tpu.memory_space<vmem>>, vector<6x8x16xf32>
    %27 = arith.mulf %7, %7 : vector<6x16x16xf32>
    %28 = vector.shape_cast %27 : vector<6x16x16xf32> to vector<6x2x8x16xf32>
    %cst_32 = arith.constant dense<0.000000e+00> : vector<6x8x16xf32>
    %29 = vector.multi_reduction <add>, %28, %cst_32 [1] : vector<6x2x8x16xf32> to vector<6x8x16xf32>
    %30 = arith.addf %26, %29 : vector<6x8x16xf32>
    %c0_33 = arith.constant 0 : index
    %c0_34 = arith.constant 0 : index
    %c0_35 = arith.constant 0 : index
    %31 = vector.load %arg9[%c0_33, %c0_34, %c0_35] : memref<6x8x16xf32, #tpu.memory_space<vmem>>, vector<6x8x16xf32>
    tpu.vector_store %arg9[%c0_33, %c0_34, %c0_35], %30 {strides = array<i32>} : memref<6x8x16xf32, #tpu.memory_space<vmem>>, vector<6x8x16xf32>,
    %c0_i32_36 = arith.constant 0 : i32
    %32 = arith.cmpi eq, %arg1, %c0_i32_36 : i32
    %33 = arith.extui %32 : i1 to i32
    %c0_i32_37 = arith.constant 0 : i32
    %34 = arith.cmpi ne, %33, %c0_i32_37 : i32
    scf.if %34 {
      %c0_38 = arith.constant 0 : index
      %c0_39 = arith.constant 0 : index
      %c0_40 = arith.constant 0 : index
      %35 = vector.load %arg6[%c0_38, %c0_39, %c0_40] : memref<6x8x16xf32, #tpu.memory_space<vmem>>, vector<6x8x16xf32>
      %cst_41 = arith.constant dense<0.000000e+00> : vector<6x16xf32>
      %36 = vector.multi_reduction <add>, %35, %cst_41 [1] : vector<6x8x16xf32> to vector<6x16xf32>
      %cst_42 = arith.constant dense<0.000000e+00> : vector<6xf32>
      %37 = vector.multi_reduction <add>, %36, %cst_42 [1] : vector<6x16xf32> to vector<6xf32>
      %38 = vector.shape_cast %37 : vector<6xf32> to vector<6x1xf32>
      %c0_43 = arith.constant 0 : index
      %c0_44 = arith.constant 0 : index
      %c0_45 = arith.constant 0 : index
      %39 = vector.load %arg5[%c0_43, %c0_44, %c0_45] : memref<1x6x4xf32, #tpu.memory_space<vmem>>, vector<1x6x1xf32>
      %40 = vector.shape_cast %39 : vector<1x6x1xf32> to vector<6x1xf32>
      %41 = vector.shape_cast %38 : vector<6x1xf32> to vector<1x6x1xf32>
      tpu.vector_store %arg5[%c0_43, %c0_44, %c0_45], %41 {strides = array<i32>} : memref<1x6x4xf32, #tpu.memory_space<vmem>>, vector<1x6x1xf32>,
      %c0_46 = arith.constant 0 : index
      %c0_47 = arith.constant 0 : index
      %c0_48 = arith.constant 0 : index
      %42 = vector.load %arg7[%c0_46, %c0_47, %c0_48] : memref<6x8x16xf32, #tpu.memory_space<vmem>>, vector<6x8x16xf32>
      %cst_49 = arith.constant dense<0.000000e+00> : vector<6x16xf32>
      %43 = vector.multi_reduction <add>, %42, %cst_49 [1] : vector<6x8x16xf32> to vector<6x16xf32>
      %cst_50 = arith.constant dense<0.000000e+00> : vector<6xf32>
      %44 = vector.multi_reduction <add>, %43, %cst_50 [1] : vector<6x16xf32> to vector<6xf32>
      %45 = vector.shape_cast %44 : vector<6xf32> to vector<6x1xf32>
      %c0_51 = arith.constant 0 : index
      %c0_52 = arith.constant 0 : index
      %c1 = arith.constant 1 : index
      %46 = vector.load %arg5[%c0_51, %c0_52, %c1] : memref<1x6x4xf32, #tpu.memory_space<vmem>>, vector<1x6x1xf32>
      %47 = vector.shape_cast %46 : vector<1x6x1xf32> to vector<6x1xf32>
      %48 = vector.shape_cast %45 : vector<6x1xf32> to vector<1x6x1xf32>
      tpu.vector_store %arg5[%c0_51, %c0_52, %c1], %48 {strides = array<i32>} : memref<1x6x4xf32, #tpu.memory_space<vmem>>, vector<1x6x1xf32>,
      %c0_53 = arith.constant 0 : index
      %c0_54 = arith.constant 0 : index
      %c0_55 = arith.constant 0 : index
      %49 = vector.load %arg8[%c0_53, %c0_54, %c0_55] : memref<6x8x16xf32, #tpu.memory_space<vmem>>, vector<6x8x16xf32>
      %cst_56 = arith.constant dense<0.000000e+00> : vector<6x16xf32>
      %50 = vector.multi_reduction <add>, %49, %cst_56 [1] : vector<6x8x16xf32> to vector<6x16xf32>
      %cst_57 = arith.constant dense<0.000000e+00> : vector<6xf32>
      %51 = vector.multi_reduction <add>, %50, %cst_57 [1] : vector<6x16xf32> to vector<6xf32>
      %52 = vector.shape_cast %51 : vector<6xf32> to vector<6x1xf32>
      %c0_58 = arith.constant 0 : index
      %c0_59 = arith.constant 0 : index
      %c2 = arith.constant 2 : index
      %53 = vector.load %arg5[%c0_58, %c0_59, %c2] : memref<1x6x4xf32, #tpu.memory_space<vmem>>, vector<1x6x1xf32>
      %54 = vector.shape_cast %53 : vector<1x6x1xf32> to vector<6x1xf32>
      %55 = vector.shape_cast %52 : vector<6x1xf32> to vector<1x6x1xf32>
      tpu.vector_store %arg5[%c0_58, %c0_59, %c2], %55 {strides = array<i32>} : memref<1x6x4xf32, #tpu.memory_space<vmem>>, vector<1x6x1xf32>,
      %c0_60 = arith.constant 0 : index
      %c0_61 = arith.constant 0 : index
      %c0_62 = arith.constant 0 : index
      %56 = vector.load %arg9[%c0_60, %c0_61, %c0_62] : memref<6x8x16xf32, #tpu.memory_space<vmem>>, vector<6x8x16xf32>
      %cst_63 = arith.constant dense<0.000000e+00> : vector<6x16xf32>
      %57 = vector.multi_reduction <add>, %56, %cst_63 [1] : vector<6x8x16xf32> to vector<6x16xf32>
      %cst_64 = arith.constant dense<0.000000e+00> : vector<6xf32>
      %58 = vector.multi_reduction <add>, %57, %cst_64 [1] : vector<6x16xf32> to vector<6xf32>
      %59 = vector.shape_cast %58 : vector<6xf32> to vector<6x1xf32>
      %c0_65 = arith.constant 0 : index
      %c0_66 = arith.constant 0 : index
      %c3 = arith.constant 3 : index
      %60 = vector.load %arg5[%c0_65, %c0_66, %c3] : memref<1x6x4xf32, #tpu.memory_space<vmem>>, vector<1x6x1xf32>
      %61 = vector.shape_cast %60 : vector<1x6x1xf32> to vector<6x1xf32>
      %62 = vector.shape_cast %59 : vector<6x1xf32> to vector<1x6x1xf32>
      tpu.vector_store %arg5[%c0_65, %c0_66, %c3], %62 {strides = array<i32>} : memref<1x6x4xf32, #tpu.memory_space<vmem>>, vector<1x6x1xf32>,
    } else {
    }
    return
  }
  func.func @transform_0(%arg0: i32, %arg1: i32) -> (i32, i32, i32) {
    %c1_i32 = arith.constant 1 : i32
    %0 = arith.muli %arg0, %c1_i32 : i32
    %1 = arith.addi %0, %arg1 : i32
    %c0_i32 = arith.constant 0 : i32
    %c0_i32_0 = arith.constant 0 : i32
    %c0_i32_1 = arith.constant 0 : i32
    return %c0_i32, %1, %c0_i32_0 : i32, i32, i32
  }
  func.func @transform_1(%arg0: i32, %arg1: i32) -> (i32, i32, i32) {
    %c1_i32 = arith.constant 1 : i32
    %0 = arith.muli %arg0, %c1_i32 : i32
    %1 = arith.addi %0, %arg1 : i32
    %c0_i32 = arith.constant 0 : i32
    %c0_i32_0 = arith.constant 0 : i32
    %c0_i32_1 = arith.constant 0 : i32
    return %c0_i32, %1, %c0_i32_0 : i32, i32, i32
  }
  func.func @transform_2(%arg0: i32, %arg1: i32) -> (i32, i32, i32) {
    %c1_i32 = arith.constant 1 : i32
    %0 = arith.muli %arg0, %c1_i32 : i32
    %1 = arith.addi %0, %arg1 : i32
    %c0_i32 = arith.constant 0 : i32
    %c0_i32_0 = arith.constant 0 : i32
    %c0_i32_1 = arith.constant 0 : i32
    return %c0_i32, %1, %c0_i32_0 : i32, i32, i32
  }
  func.func @transform_3(%arg0: i32, %arg1: i32) -> (i32, i32, i32) {
    %c0_i32 = arith.constant 0 : i32
    %c0_i32_0 = arith.constant 0 : i32
    %c0_i32_1 = arith.constant 0 : i32
    return %arg0, %c0_i32, %c0_i32_0 : i32, i32, i32
  }
}

</mosaic_0001>

<llo_original>
// kernel: tpu_custom_call.1
$region0: #{tpu_custom_call.1}
  #allocation0 [shape = 'u32[]', space=smem, size = 0x4, offset = 0x4, fixed_abs, tag = 'smem constant byte address 0x4 - core index']
  #allocation1 [shape = 'u32[144,128]{1,0:T(1,128)}', space=vmem, size = 0x12000, scoped, tag = 'internal scratch']
  #allocation2 [shape = 'f32[6,8,16]{2,1,0:T(8,128)}', space=vmem, size = 0x6000, scoped, tag = 'scratch operand']
  #allocation3 [shape = 'f32[6,8,16]{2,1,0:T(8,128)}', space=vmem, size = 0x6000, scoped, tag = 'scratch operand']
  #allocation4 [shape = 'f32[6,8,16]{2,1,0:T(8,128)}', space=vmem, size = 0x6000, scoped, tag = 'scratch operand']
  #allocation5 [shape = 'f32[6,8,16]{2,1,0:T(8,128)}', space=vmem, size = 0x6000, scoped, tag = 'scratch operand']
  #allocation11 [shape = 's32[]', space=sflag, size = 0x4, offset = 0, fixed_abs, tag = 'sflag constant byte address 0x0 - dummy sync flag']
  %s0 = inlined_call_operand.hbm [shape: f32[6,20,20], index: 0, kind: input, shape index: {}]
  %s1 = inlined_call_operand.hbm [shape: f32[6,16,16], index: 1, kind: input, shape index: {}]
  %s2 = inlined_call_operand.hbm [shape: f32[6,16,16], index: 2, kind: input, shape index: {}]
  %s3 = inlined_call_operand.vmem [shape: f32[1,6,4], index: 3, kind: output, shape index: {}]
  %s4 = sld [smem:[#allocation0]]
  $region42: #{tpu_custom_call.1} parent=0
    _
  %s6 = ssub.s32 1, %s4
  %s7 = scalar_select 0, %s6, %s4
  $region1: #{tpu_custom_call.1} parent=0
    #allocation6 [shape = 'u8[49152]{0}', space=vmem, size = 0xc000, scoped, tag = 'input window, operand 0, single buffered']
    #allocation7 [shape = 's32[1]{0}', space=sflag, size = 0x4, scoped, tag = 'scoped memory for tpu_custom_call.1']
    #allocation8 [shape = 'u8[49152]{0}', space=vmem, size = 0xc000, scoped, tag = 'input window, operand 1, single buffered']
    #allocation9 [shape = 's32[1]{0}', space=sflag, size = 0x4, scoped, tag = 'scoped memory for tpu_custom_call.1']
    #allocation10 [shape = 'u8[49152]{0}', space=vmem, size = 0xc000, scoped, tag = 'input window, operand 2, single buffered']
    %8 = vsyncpa [#allocation7], 0
    %9 = vsyncpa [#allocation9], 0
    // Predicated region
    $region2: #{tpu_custom_call.1} parent=1 // pred_check
      _
    $region3: #{tpu_custom_call.1} parent=1 // pred_check_branch
      %11 = sbr.rel (0) target = $region5
    $region4: #{tpu_custom_call.1} parent=1 // pred_region
      #allocation12 [shape = 'u32[6]{0}', space=smem, size = 0x18, scoped, tag = 'DMA stride descriptor']
      %s12 = sadd.s32 0, 0
      %s13 = smul.u32 2, %s12
      %s14 = ssub.s32 3, %s13
      %p15 = scmp.lt.s32.totalorder %s14, 2
      %s16 = scalar_select %p15, %s14, 2
      %s17 = smul.u32 768, %s16
      %s19 = ssub.s32 1536, %s17
      %20 = vsyncadd [#allocation7], %s19
      %p21 = scmp.ne.s32.totalorder 0, %s17
      %s22 = smul.addr %s13, 128
      %s23 = scalar_lea.hbm %s0, %s22
      %s24 = smul.u32 8, %s16
      %s25 = smul.u32 %s24, 6
      %s27 = sshll.u32 1, 14
      %s28 = sxor.u32 4294967295, %s27
      %s30 = sld [smem:[#allocation0]]
      %s31 = sadd.s32 2, %s30
      %s33 = sshll.u32 7, 26
      %s34 = sxor.u32 4294967295, %s33
      %s35 = sand.u32 0, %s34
      %s36 = sshll.u32 %s31, 26
      %s37 = sor.u32 %s35, %s36
      %s38 = sshll.u32 [#allocation6], 4
      %s39 = int_to_ptr.vmem [resolvable:$true] %s38
      %s40 = sshll.u32 %s25, 4
      %45 = sst [smem:[#allocation12]] 384
      %s46 = scalar_lea.smem [#allocation12], 1
      %47 = sst [smem:[%s46]] 256
      %s48 = scalar_lea.smem [#allocation12], 2
      %49 = sst [smem:[%s48]] %s16
      %s50 = scalar_lea.smem [#allocation12], 3
      %51 = sst [smem:[%s50]] 128
      %s52 = scalar_lea.smem [#allocation12], 4
      %53 = sst [smem:[%s52]] 128
      %s54 = scalar_lea.smem [#allocation12], 5
      %55 = sst [smem:[%s54]] 8
      %57 = dma.general (%p21), %s23, %s40, %s39, [#allocation7], [#allocation11], [#allocation12], %s37, 0
    $region5: #{tpu_custom_call.1} parent=1 // pred_fallthru
      _
    // Predicated region
    $region6: #{tpu_custom_call.1} parent=1 // pred_check
      _
    $region7: #{tpu_custom_call.1} parent=1 // pred_check_branch
      %59 = sbr.rel (0) target = $region9
    $region8: #{tpu_custom_call.1} parent=1 // pred_region
      %s60 = sadd.s32 0, 0
      %s61 = smul.u32 2, %s60
      %s63 = ssub.s32 1536, 1536
      %64 = vsyncadd [#allocation9], %s63
      %s65 = smul.addr %s61, 128
      %s66 = scalar_lea.hbm %s1, %s65
      %s67 = sshll.u32 [#allocation8], 4
      %s68 = int_to_ptr.vmem [resolvable:$true] %s67
      %73 = dma.hbm_to_vmem [thread:$0]  %s66, 1536, %s68, [#allocation9], 128, 128, 8
    $region9: #{tpu_custom_call.1} parent=1 // pred_fallthru
      _
    // Predicated region
    $region10: #{tpu_custom_call.1} parent=1 // pred_check
      _
    $region11: #{tpu_custom_call.1} parent=1 // pred_check_branch
      %75 = sbr.rel (0) target = $region13
    $region12: #{tpu_custom_call.1} parent=1 // pred_region
      %s76 = sadd.s32 0, 0
      %s77 = smul.u32 2, %s76
      %s79 = ssub.s32 1536, 1536
      %80 = vsyncadd [#allocation9], %s79
      %s81 = smul.addr %s77, 128
      %s82 = scalar_lea.hbm %s2, %s81
      %s83 = sshll.u32 [#allocation10], 4
      %s84 = int_to_ptr.vmem [resolvable:$true] %s83
      %89 = dma.hbm_to_vmem [thread:$0]  %s82, 1536, %s84, [#allocation9], 128, 128, 8
    $region13: #{tpu_custom_call.1} parent=1 // pred_fallthru
      _
    // Predicated region
    $region14: #{tpu_custom_call.1} parent=1 // pred_check
      _
    $region15: #{tpu_custom_call.1} parent=1 // pred_check_branch
      %91 = sbr.rel (0) target = $region17
    $region16: #{tpu_custom_call.1} parent=1 // pred_region
      %92 = dma.done [#allocation7], 1536
    $region17: #{tpu_custom_call.1} parent=1 // pred_fallthru
      _
    // Predicated region
    $region18: #{tpu_custom_call.1} parent=1 // pred_check
      _
    $region19: #{tpu_custom_call.1} parent=1 // pred_check_branch
      %94 = sbr.rel (0) target = $region21
    $region20: #{tpu_custom_call.1} parent=1 // pred_region
      %95 = dma.done [#allocation9], 1536
    $region21: #{tpu_custom_call.1} parent=1 // pred_fallthru
      _
    // Predicated region
    $region22: #{tpu_custom_call.1} parent=1 // pred_check
      _
    $region23: #{tpu_custom_call.1} parent=1 // pred_check_branch
      %97 = sbr.rel (0) target = $region25
    $region24: #{tpu_custom_call.1} parent=1 // pred_region
      %98 = dma.done [#allocation9], 1536
    $region25: #{tpu_custom_call.1} parent=1 // pred_fallthru
      _
    %s99 = sadd.s32 0, 0
    %s100 = smul.u32 2, %s99
    %s101 = ssub.s32 3, %s100
    %p102 = scmp.lt.s32.totalorder %s101, 2
    %s103 = scalar_select %p102, %s101, 2
    %s104 = smul.u32 768, %s103
    %s105 = sadd.s32 0, 0
    %s106 = smul.u32 2, %s105
    %s107 = sadd.s32 0, 0
    %s108 = smul.u32 2, %s107
    %p109 = scmp.eq.s32.totalorder 0, 0
    // Predicated region
    $region26: #{tpu_custom_call.1} parent=1 // pred_check
      %p110 = pneg %p109
    $region27: #{tpu_custom_call.1} parent=1 // pred_check_branch
      %112 = sbr.rel (%p110) target = $region29
    $region28: #{tpu_custom_call.1} parent=1 // pred_region
      %vm113 = vcmask 130048
      %114 = vst.msk [vmem:[#allocation2] sm:$0xff] %vm113, 0.0
      %115 = vst.msk [vmem:[#allocation2 + $0x8] sm:$0xff] %vm113, 0.0
      %116 = vst.msk [vmem:[#allocation2 + $0x10] sm:$0xff] %vm113, 0.0
      %117 = vst.msk [vmem:[#allocation2 + $0x18] sm:$0xff] %vm113, 0.0
      %118 = vst.msk [vmem:[#allocation2 + $0x20] sm:$0xff] %vm113, 0.0
      %119 = vst.msk [vmem:[#allocation2 + $0x28] sm:$0xff] %vm113, 0.0
      %120 = vst.msk [vmem:[#allocation3] sm:$0xff] %vm113, 0.0
      %121 = vst.msk [vmem:[#allocation3 + $0x8] sm:$0xff] %vm113, 0.0
      %122 = vst.msk [vmem:[#allocation3 + $0x10] sm:$0xff] %vm113, 0.0
      %123 = vst.msk [vmem:[#allocation3 + $0x18] sm:$0xff] %vm113, 0.0
      %124 = vst.msk [vmem:[#allocation3 + $0x20] sm:$0xff] %vm113, 0.0
      %125 = vst.msk [vmem:[#allocation3 + $0x28] sm:$0xff] %vm113, 0.0
      %126 = vst.msk [vmem:[#allocation4] sm:$0xff] %vm113, 0.0
      %127 = vst.msk [vmem:[#allocation4 + $0x8] sm:$0xff] %vm113, 0.0
      %128 = vst.msk [vmem:[#allocation4 + $0x10] sm:$0xff] %vm113, 0.0
      %129 = vst.msk [vmem:[#allocation4 + $0x18] sm:$0xff] %vm113, 0.0
      %130 = vst.msk [vmem:[#allocation4 + $0x20] sm:$0xff] %vm113, 0.0
      %131 = vst.msk [vmem:[#allocation4 + $0x28] sm:$0xff] %vm113, 0.0
      %132 = vst.msk [vmem:[#allocation5] sm:$0xff] %vm113, 0.0
      %133 = vst.msk [vmem:[#allocation5 + $0x8] sm:$0xff] %vm113, 0.0
      %134 = vst.msk [vmem:[#allocation5 + $0x10] sm:$0xff] %vm113, 0.0
      %135 = vst.msk [vmem:[#allocation5 + $0x18] sm:$0xff] %vm113, 0.0
      %136 = vst.msk [vmem:[#allocation5 + $0x20] sm:$0xff] %vm113, 0.0
      %137 = vst.msk [vmem:[#allocation5 + $0x28] sm:$0xff] %vm113, 0.0
    $region29: #{tpu_custom_call.1} parent=1 // pred_fallthru
      _
    %v138 = vld [vmem:[#allocation8] sm:$0xff]
    %v139 = vld [vmem:[#allocation8 + $0x8] sm:$0xff]
    %v140 = vld [vmem:[#allocation8 + $0x10] sm:$0xff]
    %v141 = vld [vmem:[#allocation8 + $0x18] sm:$0xff]
    %v142 = vld [vmem:[#allocation8 + $0x20] sm:$0xff]
    %v143 = vld [vmem:[#allocation8 + $0x28] sm:$0xff]
    %v144 = vld [vmem:[#allocation8 + $0x30] sm:$0xff]
    %v145 = vld [vmem:[#allocation8 + $0x38] sm:$0xff]
    %v146 = vld [vmem:[#allocation8 + $0x40] sm:$0xff]
    %v147 = vld [vmem:[#allocation8 + $0x48] sm:$0xff]
    %v148 = vld [vmem:[#allocation8 + $0x50] sm:$0xff]
    %v149 = vld [vmem:[#allocation8 + $0x58] sm:$0xff]
    %v150 = vld [vmem:[#allocation6] sm:$0xff]
    %v151 = vld [vmem:[#allocation6 + $0x8] sm:$0xff]
    %v152 = vld [vmem:[#allocation6 + $0x10] sm:$0xff]
    %v153 = vld [vmem:[#allocation6 + $0x18] sm:$0xff]
    %v154 = vld [vmem:[#allocation6 + $0x20] sm:$0xff]
    %v155 = vld [vmem:[#allocation6 + $0x28] sm:$0xff]
    %v156 = vld [vmem:[#allocation6 + $0x30] sm:$0xff]
    %v157 = vld [vmem:[#allocation6 + $0x38] sm:$0xff]
    %v158 = vld [vmem:[#allocation6 + $0x40] sm:$0xff]
    %v159 = vld [vmem:[#allocation6 + $0x48] sm:$0xff]
    %v160 = vld [vmem:[#allocation6 + $0x50] sm:$0xff]
    %v161 = vld [vmem:[#allocation6 + $0x58] sm:$0xff]
    %v162 = vsub.f32 %v150, %v138
    %v163 = vsub.f32 %v151, %v139
    %v164 = vsub.f32 %v152, %v140
    %v165 = vsub.f32 %v153, %v141
    %v166 = vsub.f32 %v154, %v142
    %v167 = vsub.f32 %v155, %v143
    %v168 = vsub.f32 %v156, %v144
    %v169 = vsub.f32 %v157, %v145
    %v170 = vsub.f32 %v158, %v146
    %v171 = vsub.f32 %v159, %v147
    %v172 = vsub.f32 %v160, %v148
    %v173 = vsub.f32 %v161, %v149
    %v174 = vld [vmem:[#allocation10] sm:$0xff]
    %v175 = vld [vmem:[#allocation10 + $0x8] sm:$0xff]
    %v176 = vld [vmem:[#allocation10 + $0x10] sm:$0xff]
    %v177 = vld [vmem:[#allocation10 + $0x18] sm:$0xff]
    %v178 = vld [vmem:[#allocation10 + $0x20] sm:$0xff]
    %v179 = vld [vmem:[#allocation10 + $0x28] sm:$0xff]
    %v180 = vld [vmem:[#allocation10 + $0x30] sm:$0xff]
    %v181 = vld [vmem:[#allocation10 + $0x38] sm:$0xff]
    %v182 = vld [vmem:[#allocation10 + $0x40] sm:$0xff]
    %v183 = vld [vmem:[#allocation10 + $0x48] sm:$0xff]
    %v184 = vld [vmem:[#allocation10 + $0x50] sm:$0xff]
    %v185 = vld [vmem:[#allocation10 + $0x58] sm:$0xff]
    %v186 = vsub.f32 %v174, %v138
    %v187 = vsub.f32 %v175, %v139
    %v188 = vsub.f32 %v176, %v140
    %v189 = vsub.f32 %v177, %v141
    %v190 = vsub.f32 %v178, %v142
    %v191 = vsub.f32 %v179, %v143
    %v192 = vsub.f32 %v180, %v144
    %v193 = vsub.f32 %v181, %v145
    %v194 = vsub.f32 %v182, %v146
    %v195 = vsub.f32 %v183, %v147
    %v196 = vsub.f32 %v184, %v148
    %v197 = vsub.f32 %v185, %v149
    %v198 = vld [vmem:[#allocation2] sm:$0xff]
    %v199 = vld [vmem:[#allocation2 + $0x8] sm:$0xff]
    %v200 = vld [vmem:[#allocation2 + $0x10] sm:$0xff]
    %v201 = vld [vmem:[#allocation2 + $0x18] sm:$0xff]
    %v202 = vld [vmem:[#allocation2 + $0x20] sm:$0xff]
    %v203 = vld [vmem:[#allocation2 + $0x28] sm:$0xff]
    %v204 = vand.u32 2147483647, %v162
    %v205 = vand.u32 2147483647, %v163
    %v206 = vand.u32 2147483647, %v164
    %v207 = vand.u32 2147483647, %v165
    %v208 = vand.u32 2147483647, %v166
    %v209 = vand.u32 2147483647, %v167
    %v210 = vand.u32 2147483647, %v168
    %v211 = vand.u32 2147483647, %v169
    %v212 = vand.u32 2147483647, %v170
    %v213 = vand.u32 2147483647, %v171
    %v214 = vand.u32 2147483647, %v172
    %v215 = vand.u32 2147483647, %v173
    %vm216 = vcmask 130048
    %v217 = vsel %vm216, %v204, 0.0
    %v218 = vsel %vm216, %v205, 0.0
    %v219 = vadd.f32 %v217, %v218
    %v220 = vsel %vm216, %v206, 0.0
    %v221 = vsel %vm216, %v207, 0.0
    %v222 = vadd.f32 %v220, %v221
    %v223 = vsel %vm216, %v208, 0.0
    %v224 = vsel %vm216, %v209, 0.0
    %v225 = vadd.f32 %v223, %v224
    %v226 = vsel %vm216, %v210, 0.0
    %v227 = vsel %vm216, %v211, 0.0
    %v228 = vadd.f32 %v226, %v227
    %v229 = vsel %vm216, %v212, 0.0
    %v230 = vsel %vm216, %v213, 0.0
    %v231 = vadd.f32 %v229, %v230
    %v232 = vsel %vm216, %v214, 0.0
    %v233 = vsel %vm216, %v215, 0.0
    %v234 = vadd.f32 %v232, %v233
    %v235 = vadd.f32 %v198, %v219
    %v236 = vadd.f32 %v199, %v222
    %v237 = vadd.f32 %v200, %v225
    %v238 = vadd.f32 %v201, %v228
    %v239 = vadd.f32 %v202, %v231
    %v240 = vadd.f32 %v203, %v234
    %241 = vst.msk [vmem:[#allocation2] sm:$0xff] %vm216, %v235
    %242 = vst.msk [vmem:[#allocation2 + $0x8] sm:$0xff] %vm216, %v236
    %243 = vst.msk [vmem:[#allocation2 + $0x10] sm:$0xff] %vm216, %v237
    %244 = vst.msk [vmem:[#allocation2 + $0x18] sm:$0xff] %vm216, %v238
    %245 = vst.msk [vmem:[#allocation2 + $0x20] sm:$0xff] %vm216, %v239
    %246 = vst.msk [vmem:[#allocation2 + $0x28] sm:$0xff] %vm216, %v240
    %v247 = vld [vmem:[#allocation3] sm:$0xff]
    %v248 = vld [vmem:[#allocation3 + $0x8] sm:$0xff]
    %v249 = vld [vmem:[#allocation3 + $0x10] sm:$0xff]
    %v250 = vld [vmem:[#allocation3 + $0x18] sm:$0xff]
    %v251 = vld [vmem:[#allocation3 + $0x20] sm:$0xff]
    %v252 = vld [vmem:[#allocation3 + $0x28] sm:$0xff]
    %v253 = vmul.f32 %v162, %v162
    %v254 = vmul.f32 %v163, %v163
    %v255 = vmul.f32 %v164, %v164
    %v256 = vmul.f32 %v165, %v165
    %v257 = vmul.f32 %v166, %v166
    %v258 = vmul.f32 %v167, %v167
    %v259 = vmul.f32 %v168, %v168
    %v260 = vmul.f32 %v169, %v169
    %v261 = vmul.f32 %v170, %v170
    %v262 = vmul.f32 %v171, %v171
    %v263 = vmul.f32 %v172, %v172
    %v264 = vmul.f32 %v173, %v173
    %v265 = vsel %vm216, %v253, 0.0
    %v266 = vsel %vm216, %v254, 0.0
    %v267 = vadd.f32 %v265, %v266
    %v268 = vsel %vm216, %v255, 0.0
    %v269 = vsel %vm216, %v256, 0.0
    %v270 = vadd.f32 %v268, %v269
    %v271 = vsel %vm216, %v257, 0.0
    %v272 = vsel %vm216, %v258, 0.0
    %v273 = vadd.f32 %v271, %v272
    %v274 = vsel %vm216, %v259, 0.0
    %v275 = vsel %vm216, %v260, 0.0
    %v276 = vadd.f32 %v274, %v275
    %v277 = vsel %vm216, %v261, 0.0
    %v278 = vsel %vm216, %v262, 0.0
    %v279 = vadd.f32 %v277, %v278
    %v280 = vsel %vm216, %v263, 0.0
    %v281 = vsel %vm216, %v264, 0.0
    %v282 = vadd.f32 %v280, %v281
    %v283 = vadd.f32 %v247, %v267
    %v284 = vadd.f32 %v248, %v270
    %v285 = vadd.f32 %v249, %v273
    %v286 = vadd.f32 %v250, %v276
    %v287 = vadd.f32 %v251, %v279
    %v288 = vadd.f32 %v252, %v282
    %289 = vst.msk [vmem:[#allocation3] sm:$0xff] %vm216, %v283
    %290 = vst.msk [vmem:[#allocation3 + $0x8] sm:$0xff] %vm216, %v284
    %291 = vst.msk [vmem:[#allocation3 + $0x10] sm:$0xff] %vm216, %v285
    %292 = vst.msk [vmem:[#allocation3 + $0x18] sm:$0xff] %vm216, %v286
    %293 = vst.msk [vmem:[#allocation3 + $0x20] sm:$0xff] %vm216, %v287
    %294 = vst.msk [vmem:[#allocation3 + $0x28] sm:$0xff] %vm216, %v288
    %v295 = vld [vmem:[#allocation4] sm:$0xff]
    %v296 = vld [vmem:[#allocation4 + $0x8] sm:$0xff]
    %v297 = vld [vmem:[#allocation4 + $0x10] sm:$0xff]
    %v298 = vld [vmem:[#allocation4 + $0x18] sm:$0xff]
    %v299 = vld [vmem:[#allocation4 + $0x20] sm:$0xff]
    %v300 = vld [vmem:[#allocation4 + $0x28] sm:$0xff]
    %v301 = vand.u32 2147483647, %v186
    %v302 = vand.u32 2147483647, %v187
    %v303 = vand.u32 2147483647, %v188
    %v304 = vand.u32 2147483647, %v189
    %v305 = vand.u32 2147483647, %v190
    %v306 = vand.u32 2147483647, %v191
    %v307 = vand.u32 2147483647, %v192
    %v308 = vand.u32 2147483647, %v193
    %v309 = vand.u32 2147483647, %v194
    %v310 = vand.u32 2147483647, %v195
    %v311 = vand.u32 2147483647, %v196
    %v312 = vand.u32 2147483647, %v197
    %v313 = vsel %vm216, %v301, 0.0
    %v314 = vsel %vm216, %v302, 0.0
    %v315 = vadd.f32 %v313, %v314
    %v316 = vsel %vm216, %v303, 0.0
    %v317 = vsel %vm216, %v304, 0.0
    %v318 = vadd.f32 %v316, %v317
    %v319 = vsel %vm216, %v305, 0.0
    %v320 = vsel %vm216, %v306, 0.0
    %v321 = vadd.f32 %v319, %v320
    %v322 = vsel %vm216, %v307, 0.0
    %v323 = vsel %vm216, %v308, 0.0
    %v324 = vadd.f32 %v322, %v323
    %v325 = vsel %vm216, %v309, 0.0
    %v326 = vsel %vm216, %v310, 0.0
    %v327 = vadd.f32 %v325, %v326
    %v328 = vsel %vm216, %v311, 0.0
    %v329 = vsel %vm216, %v312, 0.0
    %v330 = vadd.f32 %v328, %v329
    %v331 = vadd.f32 %v295, %v315
    %v332 = vadd.f32 %v296, %v318
    %v333 = vadd.f32 %v297, %v321
    %v334 = vadd.f32 %v298, %v324
    %v335 = vadd.f32 %v299, %v327
    %v336 = vadd.f32 %v300, %v330
    %337 = vst.msk [vmem:[#allocation4] sm:$0xff] %vm216, %v331
    %338 = vst.msk [vmem:[#allocation4 + $0x8] sm:$0xff] %vm216, %v332
    %339 = vst.msk [vmem:[#allocation4 + $0x10] sm:$0xff] %vm216, %v333
    %340 = vst.msk [vmem:[#allocation4 + $0x18] sm:$0xff] %vm216, %v334
    %341 = vst.msk [vmem:[#allocation4 + $0x20] sm:$0xff] %vm216, %v335
    %342 = vst.msk [vmem:[#allocation4 + $0x28] sm:$0xff] %vm216, %v336
    %v343 = vld [vmem:[#allocation5] sm:$0xff]
    %v344 = vld [vmem:[#allocation5 + $0x8] sm:$0xff]
    %v345 = vld [vmem:[#allocation5 + $0x10] sm:$0xff]
    %v346 = vld [vmem:[#allocation5 + $0x18] sm:$0xff]
    %v347 = vld [vmem:[#allocation5 + $0x20] sm:$0xff]
    %v348 = vld [vmem:[#allocation5 + $0x28] sm:$0xff]
    %v349 = vmul.f32 %v186, %v186
    %v350 = vmul.f32 %v187, %v187
    %v351 = vmul.f32 %v188, %v188
    %v352 = vmul.f32 %v189, %v189
    %v353 = vmul.f32 %v190, %v190
    %v354 = vmul.f32 %v191, %v191
    %v355 = vmul.f32 %v192, %v192
    %v356 = vmul.f32 %v193, %v193
    %v357 = vmul.f32 %v194, %v194
    %v358 = vmul.f32 %v195, %v195
    %v359 = vmul.f32 %v196, %v196
    %v360 = vmul.f32 %v197, %v197
    %v361 = vsel %vm216, %v349, 0.0
    %v362 = vsel %vm216, %v350, 0.0
    %v363 = vadd.f32 %v361, %v362
    %v364 = vsel %vm216, %v351, 0.0
    %v365 = vsel %vm216, %v352, 0.0
    %v366 = vadd.f32 %v364, %v365
    %v367 = vsel %vm216, %v353, 0.0
    %v368 = vsel %vm216, %v354, 0.0
    %v369 = vadd.f32 %v367, %v368
    %v370 = vsel %vm216, %v355, 0.0
    %v371 = vsel %vm216, %v356, 0.0
    %v372 = vadd.f32 %v370, %v371
    %v373 = vsel %vm216, %v357, 0.0
    %v374 = vsel %vm216, %v358, 0.0
    %v375 = vadd.f32 %v373, %v374
    %v376 = vsel %vm216, %v359, 0.0
    %v377 = vsel %vm216, %v360, 0.0
    %v378 = vadd.f32 %v376, %v377
    %v379 = vadd.f32 %v343, %v363
    %v380 = vadd.f32 %v344, %v366
    %v381 = vadd.f32 %v345, %v369
    %v382 = vadd.f32 %v346, %v372
    %v383 = vadd.f32 %v347, %v375
    %v384 = vadd.f32 %v348, %v378
    %385 = vst.msk [vmem:[#allocation5] sm:$0xff] %vm216, %v379
    %386 = vst.msk [vmem:[#allocation5 + $0x8] sm:$0xff] %vm216, %v380
    %387 = vst.msk [vmem:[#allocation5 + $0x10] sm:$0xff] %vm216, %v381
    %388 = vst.msk [vmem:[#allocation5 + $0x18] sm:$0xff] %vm216, %v382
    %389 = vst.msk [vmem:[#allocation5 + $0x20] sm:$0xff] %vm216, %v383
    %390 = vst.msk [vmem:[#allocation5 + $0x28] sm:$0xff] %vm216, %v384
    // Predicated region
    $region30: #{tpu_custom_call.1} parent=1 // pred_check
      %p391 = pneg %p109
    $region31: #{tpu_custom_call.1} parent=1 // pred_check_branch
      %393 = sbr.rel (%p391) target = $region33
    $region32: #{tpu_custom_call.1} parent=1 // pred_region
      %v394 = vld [vmem:[#allocation2] sm:$0xff]
      %v395 = vld [vmem:[#allocation2 + $0x8] sm:$0xff]
      %v396 = vld [vmem:[#allocation2 + $0x10] sm:$0xff]
      %v397 = vld [vmem:[#allocation2 + $0x18] sm:$0xff]
      %v398 = vld [vmem:[#allocation2 + $0x20] sm:$0xff]
      %v399 = vld [vmem:[#allocation2 + $0x28] sm:$0xff]
      %v400 = vsel %vm216, %v394, 0.0
      %v401 = vrot.slane %v400, 4
      %v402 = vadd.f32 %v400, %v401
      %v403 = vrot.slane %v402, 2
      %v404 = vadd.f32 %v402, %v403
      %v405 = vrot.slane %v404, 1
      %v406 = vadd.f32 %v404, %v405
      %v407 = vsel %vm216, %v395, 0.0
      %v408 = vrot.slane %v407, 4
      %v409 = vadd.f32 %v407, %v408
      %v410 = vrot.slane %v409, 2
      %v411 = vadd.f32 %v409, %v410
      %v412 = vrot.slane %v411, 1
      %v413 = vadd.f32 %v411, %v412
      %v414 = vsel %vm216, %v396, 0.0
      %v415 = vrot.slane %v414, 4
      %v416 = vadd.f32 %v414, %v415
      %v417 = vrot.slane %v416, 2
      %v418 = vadd.f32 %v416, %v417
      %v419 = vrot.slane %v418, 1
      %v420 = vadd.f32 %v418, %v419
      %v421 = vsel %vm216, %v397, 0.0
      %v422 = vrot.slane %v421, 4
      %v423 = vadd.f32 %v421, %v422
      %v424 = vrot.slane %v423, 2
      %v425 = vadd.f32 %v423, %v424
      %v426 = vrot.slane %v425, 1
      %v427 = vadd.f32 %v425, %v426
      %v428 = vsel %vm216, %v398, 0.0
      %v429 = vrot.slane %v428, 4
      %v430 = vadd.f32 %v428, %v429
      %v431 = vrot.slane %v430, 2
      %v432 = vadd.f32 %v430, %v431
      %v433 = vrot.slane %v432, 1
      %v434 = vadd.f32 %v432, %v433
      %v435 = vsel %vm216, %v399, 0.0
      %v436 = vrot.slane %v435, 4
      %v437 = vadd.f32 %v435, %v436
      %v438 = vrot.slane %v437, 2
      %v439 = vadd.f32 %v437, %v438
      %v440 = vrot.slane %v439, 1
      %v441 = vadd.f32 %v439, %v440
      %vm448 = vcmask 1041409
      %v449 = vsel %vm448, %v413, %v406
      %vm450 = vcmask 1042434
      %v451 = vsel %vm450, %v420, %v449
      %vm452 = vcmask 1043459
      %v453 = vsel %vm452, %v427, %v451
      %vm454 = vcmask 1044484
      %v455 = vsel %vm454, %v434, %v453
      %vm456 = vcmask 1045509
      %v457 = vsel %vm456, %v441, %v455
      %vm459 = vcmask 128000
      %v460 = vsel %vm459, %v457, 0.0
      %461 = vadd.xlane.f32.xlu0 %v460
      %v462 = vpop.xlane.xlu0 %461
      %vm463 = vcmask 5120
      %464 = vst.msk [vmem:[%s3] sm:$0x3f] %vm463, %v462
      %v465 = vld [vmem:[#allocation3] sm:$0xff]
      %v466 = vld [vmem:[#allocation3 + $0x8] sm:$0xff]
      %v467 = vld [vmem:[#allocation3 + $0x10] sm:$0xff]
      %v468 = vld [vmem:[#allocation3 + $0x18] sm:$0xff]
      %v469 = vld [vmem:[#allocation3 + $0x20] sm:$0xff]
      %v470 = vld [vmem:[#allocation3 + $0x28] sm:$0xff]
      %v471 = vsel %vm216, %v465, 0.0
      %v472 = vrot.slane %v471, 4
      %v473 = vadd.f32 %v471, %v472
      %v474 = vrot.slane %v473, 2
      %v475 = vadd.f32 %v473, %v474
      %v476 = vrot.slane %v475, 1
      %v477 = vadd.f32 %v475, %v476
      %v478 = vsel %vm216, %v466, 0.0
      %v479 = vrot.slane %v478, 4
      %v480 = vadd.f32 %v478, %v479
      %v481 = vrot.slane %v480, 2
      %v482 = vadd.f32 %v480, %v481
      %v483 = vrot.slane %v482, 1
      %v484 = vadd.f32 %v482, %v483
      %v485 = vsel %vm216, %v467, 0.0
      %v486 = vrot.slane %v485, 4
      %v487 = vadd.f32 %v485, %v486
      %v488 = vrot.slane %v487, 2
      %v489 = vadd.f32 %v487, %v488
      %v490 = vrot.slane %v489, 1
      %v491 = vadd.f32 %v489, %v490
      %v492 = vsel %vm216, %v468, 0.0
      %v493 = vrot.slane %v492, 4
      %v494 = vadd.f32 %v492, %v493
      %v495 = vrot.slane %v494, 2
      %v496 = vadd.f32 %v494, %v495
      %v497 = vrot.slane %v496, 1
      %v498 = vadd.f32 %v496, %v497
      %v499 = vsel %vm216, %v469, 0.0
      %v500 = vrot.slane %v499, 4
      %v501 = vadd.f32 %v499, %v500
      %v502 = vrot.slane %v501, 2
      %v503 = vadd.f32 %v501, %v502
      %v504 = vrot.slane %v503, 1
      %v505 = vadd.f32 %v503, %v504
      %v506 = vsel %vm216, %v470, 0.0
      %v507 = vrot.slane %v506, 4
      %v508 = vadd.f32 %v506, %v507
      %v509 = vrot.slane %v508, 2
      %v510 = vadd.f32 %v508, %v509
      %v511 = vrot.slane %v510, 1
      %v512 = vadd.f32 %v510, %v511
      %v519 = vsel %vm448, %v484, %v477
      %v520 = vsel %vm450, %v491, %v519
      %v521 = vsel %vm452, %v498, %v520
      %v522 = vsel %vm454, %v505, %v521
      %v523 = vsel %vm456, %v512, %v522
      %v525 = vsel %vm459, %v523, 0.0
      %526 = vadd.xlane.f32.xlu0 %v525
      %v527 = vpop.xlane.xlu0 %526
      %vm528 = vcmask 13320
      %529 = vst.msk [vmem:[%s3] sm:$0x3f] %vm528, %v527
      %v530 = vld [vmem:[#allocation4] sm:$0xff]
      %v531 = vld [vmem:[#allocation4 + $0x8] sm:$0xff]
      %v532 = vld [vmem:[#allocation4 + $0x10] sm:$0xff]
      %v533 = vld [vmem:[#allocation4 + $0x18] sm:$0xff]
      %v534 = vld [vmem:[#allocation4 + $0x20] sm:$0xff]
      %v535 = vld [vmem:[#allocation4 + $0x28] sm:$0xff]
      %v536 = vsel %vm216, %v530, 0.0
      %v537 = vrot.slane %v536, 4
      %v538 = vadd.f32 %v536, %v537
      %v539 = vrot.slane %v538, 2
      %v540 = vadd.f32 %v538, %v539
      %v541 = vrot.slane %v540, 1
      %v542 = vadd.f32 %v540, %v541
      %v543 = vsel %vm216, %v531, 0.0
      %v544 = vrot.slane %v543, 4
      %v545 = vadd.f32 %v543, %v544
      %v546 = vrot.slane %v545, 2
      %v547 = vadd.f32 %v545, %v546
      %v548 = vrot.slane %v547, 1
      %v549 = vadd.f32 %v547, %v548
      %v550 = vsel %vm216, %v532, 0.0
      %v551 = vrot.slane %v550, 4
      %v552 = vadd.f32 %v550, %v551
      %v553 = vrot.slane %v552, 2
      %v554 = vadd.f32 %v552, %v553
      %v555 = vrot.slane %v554, 1
      %v556 = vadd.f32 %v554, %v555
      %v557 = vsel %vm216, %v533, 0.0
      %v558 = vrot.slane %v557, 4
      %v559 = vadd.f32 %v557, %v558
      %v560 = vrot.slane %v559, 2
      %v561 = vadd.f32 %v559, %v560
      %v562 = vrot.slane %v561, 1
      %v563 = vadd.f32 %v561, %v562
      %v564 = vsel %vm216, %v534, 0.0
      %v565 = vrot.slane %v564, 4
      %v566 = vadd.f32 %v564, %v565
      %v567 = vrot.slane %v566, 2
      %v568 = vadd.f32 %v566, %v567
      %v569 = vrot.slane %v568, 1
      %v570 = vadd.f32 %v568, %v569
      %v571 = vsel %vm216, %v535, 0.0
      %v572 = vrot.slane %v571, 4
      %v573 = vadd.f32 %v571, %v572
      %v574 = vrot.slane %v573, 2
      %v575 = vadd.f32 %v573, %v574
      %v576 = vrot.slane %v575, 1
      %v577 = vadd.f32 %v575, %v576
      %v584 = vsel %vm448, %v549, %v542
      %v585 = vsel %vm450, %v556, %v584
      %v586 = vsel %vm452, %v563, %v585
      %v587 = vsel %vm454, %v570, %v586
      %v588 = vsel %vm456, %v577, %v587
      %v590 = vsel %vm459, %v588, 0.0
      %591 = vadd.xlane.f32.xlu0 %v590
      %v592 = vpop.xlane.xlu0 %591
      %vm593 = vcmask 21520
      %594 = vst.msk [vmem:[%s3] sm:$0x3f] %vm593, %v592
      %v595 = vld [vmem:[#allocation5] sm:$0xff]
      %v596 = vld [vmem:[#allocation5 + $0x8] sm:$0xff]
      %v597 = vld [vmem:[#allocation5 + $0x10] sm:$0xff]
      %v598 = vld [vmem:[#allocation5 + $0x18] sm:$0xff]
      %v599 = vld [vmem:[#allocation5 + $0x20] sm:$0xff]
      %v600 = vld [vmem:[#allocation5 + $0x28] sm:$0xff]
      %v601 = vsel %vm216, %v595, 0.0
      %v602 = vrot.slane %v601, 4
      %v603 = vadd.f32 %v601, %v602
      %v604 = vrot.slane %v603, 2
      %v605 = vadd.f32 %v603, %v604
      %v606 = vrot.slane %v605, 1
      %v607 = vadd.f32 %v605, %v606
      %v608 = vsel %vm216, %v596, 0.0
      %v609 = vrot.slane %v608, 4
      %v610 = vadd.f32 %v608, %v609
      %v611 = vrot.slane %v610, 2
      %v612 = vadd.f32 %v610, %v611
      %v613 = vrot.slane %v612, 1
      %v614 = vadd.f32 %v612, %v613
      %v615 = vsel %vm216, %v597, 0.0
      %v616 = vrot.slane %v615, 4
      %v617 = vadd.f32 %v615, %v616
      %v618 = vrot.slane %v617, 2
      %v619 = vadd.f32 %v617, %v618
      %v620 = vrot.slane %v619, 1
      %v621 = vadd.f32 %v619, %v620
      %v622 = vsel %vm216, %v598, 0.0
      %v623 = vrot.slane %v622, 4
      %v624 = vadd.f32 %v622, %v623
      %v625 = vrot.slane %v624, 2
      %v626 = vadd.f32 %v624, %v625
      %v627 = vrot.slane %v626, 1
      %v628 = vadd.f32 %v626, %v627
      %v629 = vsel %vm216, %v599, 0.0
      %v630 = vrot.slane %v629, 4
      %v631 = vadd.f32 %v629, %v630
      %v632 = vrot.slane %v631, 2
      %v633 = vadd.f32 %v631, %v632
      %v634 = vrot.slane %v633, 1
      %v635 = vadd.f32 %v633, %v634
      %v636 = vsel %vm216, %v600, 0.0
      %v637 = vrot.slane %v636, 4
      %v638 = vadd.f32 %v636, %v637
      %v639 = vrot.slane %v638, 2
      %v640 = vadd.f32 %v638, %v639
      %v641 = vrot.slane %v640, 1
      %v642 = vadd.f32 %v640, %v641
      %v649 = vsel %vm448, %v614, %v607
      %v650 = vsel %vm450, %v621, %v649
      %v651 = vsel %vm452, %v628, %v650
      %v652 = vsel %vm454, %v635, %v651
      %v653 = vsel %vm456, %v642, %v652
      %v655 = vsel %vm459, %v653, 0.0
      %656 = vadd.xlane.f32.xlu0 %v655
      %v657 = vpop.xlane.xlu0 %656
      %vm658 = vcmask 29720
      %659 = vst.msk [vmem:[%s3] sm:$0x3f] %vm658, %v657
    $region33: #{tpu_custom_call.1} parent=1 // pred_fallthru
      _
    // Predicated region
    $region34: #{tpu_custom_call.1} parent=1 // pred_check
      _
    $region35: #{tpu_custom_call.1} parent=1 // pred_check_branch
      %661 = sbr.rel (0) target = $region37
    $region36: #{tpu_custom_call.1} parent=1 // pred_region
      _
    $region37: #{tpu_custom_call.1} parent=1 // pred_fallthru
      _
    // Predicated region
    $region38: #{tpu_custom_call.1} parent=1 // pred_check
      _
    $region39: #{tpu_custom_call.1} parent=1 // pred_check_branch
      %663 = sbr.rel (0) target = $region41
    $region40: #{tpu_custom_call.1} parent=1 // pred_region
      _
    $region41: #{tpu_custom_call.1} parent=1 // pred_fallthru
      _
    %664 = vsyncpa [#allocation7], 1
    %665 = vsyncpa [#allocation9], 1

</llo_original>
